<compile_context>
chip_gen: v7x
topology: tpu7x:2x2x1
jax: 0.10.0
libtpu: 0.0.40
codegen_flags: <defaults>
</compile_context>

<pallas_src>
import functools
import math

import jax
import jax.numpy as jnp
from jax.experimental import pallas as pl
from jax.experimental.pallas import tpu as pltpu

# Finite "minus infinity" (same trick as the reference flash-attention kernels)
# so every exp() argument stays finite and no inf - inf NaNs can appear.
_MASK_VALUE = -0.7 * float(jnp.finfo(jnp.float32).max)


def _round_up(x, m):
    return ((x + m - 1) // m) * m


def _flash_attention_kernel(q_ref, k_ref, v_ref, o_ref,
                            m_ref, l_ref, acc_ref,
                            *, scale, kv_len, block_k, mask_kv):
    kv_idx = pl.program_id(2)

    @pl.when(kv_idx == 0)
    def _init():
        m_ref[...] = jnp.full(m_ref.shape, _MASK_VALUE, dtype=m_ref.dtype)
        l_ref[...] = jnp.zeros(l_ref.shape, dtype=l_ref.dtype)
        acc_ref[...] = jnp.zeros(acc_ref.shape, dtype=acc_ref.dtype)

    # Fold 1/sqrt(d) into q (d columns, not bk columns); keep native dtype so
    # the MXU runs at full rate, accumulate in f32.
    q = q_ref[0] * scale                                     # (bq, d)
    k = k_ref[0]                                             # (bk, d)
    v = v_ref[0]                                             # (bk, d)

    # s = q @ k^T, contracting the last dim of both (no XLU transpose of k).
    s = jax.lax.dot_general(
        q, k, (((1,), (1,)), ((), ())),
        preferred_element_type=jnp.float32)                  # (bq, bk)

    if mask_kv:  # static flag: only emitted when kv was zero-padded
        kv_ids = kv_idx * block_k + jax.lax.broadcasted_iota(
            jnp.int32, s.shape, 1)
        s = jnp.where(kv_ids < kv_len, s, _MASK_VALUE)

    # Online softmax update (all statistics in f32).
    m_prev = m_ref[...]                                      # (bq, 1)
    m_new = jnp.maximum(m_prev, jnp.max(s, axis=-1, keepdims=True))
    alpha = jnp.exp(m_prev - m_new)
    p = jnp.exp(s - m_new)                                   # (bq, bk)

    l_ref[...] = alpha * l_ref[...] + jnp.sum(p, axis=-1, keepdims=True)
    acc_ref[...] = alpha * acc_ref[...] + jax.lax.dot_general(
        p.astype(v.dtype), v, (((1,), (0,)), ((), ())),
        preferred_element_type=jnp.float32)                  # (bq, d)
    m_ref[...] = m_new

    @pl.when(kv_idx == pl.num_programs(2) - 1)
    def _finalize():
        l = l_ref[...]
        inv_l = pl.reciprocal(l, approx=True)          # EUP slot, nearly free
        inv_l = inv_l * (2.0 - l * inv_l)              # one Newton step -> ~f32
        o_ref[0] = (acc_ref[...] * inv_l).astype(o_ref.dtype)


def full_attention(q, k, v, *, block_q=512, block_k=512):
    """q, k, v: (b, t, n, d) -> out: (b, t, n, d)."""
    assert q.shape == k.shape == v.shape, "q/k/v must share (b, t, n, d)"
    b, t, n, d = q.shape
    out_dtype = q.dtype
    scale = 1.0 / math.sqrt(d)

    # (b, t, n, d) -> (b*n, t, d): one contiguous (t, d) slab per (batch, head).
    # TODO(synk): keep activations pre-transposed upstream (and d-packed heads
    # for lane-dense stores when d < 128) to remove these extra HBM passes.
    def to_heads(x):
        return jnp.transpose(x, (0, 2, 1, 3)).reshape(b * n, t, d)

    qh, kh, vh = to_heads(q), to_heads(k), to_heads(v)

    # Tile sizes: bounded by the (padded) sequence length; VMEM per step is
    # ~ bq*bk f32 scores + small q/k/v/acc slabs, well under the 32 MiB scoped
    # default on every generation (v5e/v6e/v7x) at 512x512.
    bq = min(block_q, _round_up(t, 8))
    bk = min(block_k, _round_up(t, 128))
    tq_pad = _round_up(t, bq)
    tk_pad = _round_up(t, bk)

    if tq_pad != t:
        qh = jnp.pad(qh, ((0, 0), (0, tq_pad - t), (0, 0)))
    if tk_pad != t:
        kh = jnp.pad(kh, ((0, 0), (0, tk_pad - t), (0, 0)))
        vh = jnp.pad(vh, ((0, 0), (0, tk_pad - t), (0, 0)))

    grid = (b * n, tq_pad // bq, tk_pad // bk)

    kernel = functools.partial(
        _flash_attention_kernel,
        scale=scale,
        kv_len=t,
        block_k=bk,
        mask_kv=(tk_pad != t),
    )

    itemsize = jnp.dtype(out_dtype).itemsize
    cost = pl.CostEstimate(
        flops=4 * b * n * t * t * d,            # QK^T + PV
        transcendentals=b * n * t * t,          # exp
        bytes_accessed=4 * b * n * t * d * itemsize,
    )

    out = pl.pallas_call(
        kernel,
        out_shape=jax.ShapeDtypeStruct((b * n, tq_pad, d), out_dtype),
        grid=grid,
        in_specs=[
            pl.BlockSpec((1, bq, d), lambda bh, qi, ki: (bh, qi, 0)),
            pl.BlockSpec((1, bk, d), lambda bh, qi, ki: (bh, ki, 0)),
            pl.BlockSpec((1, bk, d), lambda bh, qi, ki: (bh, ki, 0)),
        ],
        out_specs=pl.BlockSpec((1, bq, d), lambda bh, qi, ki: (bh, qi, 0)),
        scratch_shapes=[
            pltpu.VMEM((bq, 1), jnp.float32),   # running max
            pltpu.VMEM((bq, 1), jnp.float32),   # running denominator
            pltpu.VMEM((bq, d), jnp.float32),   # f32 output accumulator
        ],
        compiler_params=pltpu.CompilerParams(
            dimension_semantics=("parallel", "parallel", "arbitrary")),
        cost_estimate=cost,
    )(qh, kh, vh)

    out = out[:, :t, :]
    return jnp.transpose(out.reshape(b, n, t, d), (0, 2, 1, 3))


def _reference(q, k, v):
    b, t, n, d = q.shape
    s = jnp.einsum("btnd,bsnd->bnts", q, k) / math.sqrt(d)
    a = jax.nn.softmax(s, axis=-1)
    return jnp.einsum("bnts,bsnd->btnd", a, v)


if __name__ == "__main__":
    # Small shapes consistent with the module's (b, t, n, d) convention.
    b, t, n, d = 2, 8, 4, 32
    key = jax.random.PRNGKey(0)
    kq, kk, kv = jax.random.split(key, 3)
    q = jax.random.normal(kq, (b, t, n, d), dtype=jnp.float32)
    k = jax.random.normal(kk, (b, t, n, d), dtype=jnp.float32)
    v = jax.random.normal(kv, (b, t, n, d), dtype=jnp.float32)

    out = jax.block_until_ready(full_attention(q, k, v))
    ref = _reference(q, k, v)
    assert out.shape == (b, t, n, d)
    assert jnp.allclose(out, ref, atol=1e-4, rtol=1e-4), "mismatch vs reference"

    # Second check exercising multiple q/kv tiles, online-softmax accumulation,
    # and the kv-padding mask (t not a multiple of the tile sizes).
    b2, t2, n2, d2 = 1, 200, 2, 64
    k2q, k2k, k2v = jax.random.split(jax.random.PRNGKey(1), 3)
    q2 = jax.random.normal(k2q, (b2, t2, n2, d2), dtype=jnp.float32)
    k2 = jax.random.normal(k2k, (b2, t2, n2, d2), dtype=jnp.float32)
    v2 = jax.random.normal(k2v, (b2, t2, n2, d2), dtype=jnp.float32)
    out2 = jax.block_until_ready(
        full_attention(q2, k2, v2, block_q=64, block_k=128))
    ref2 = _reference(q2, k2, v2)
    assert jnp.allclose(out2, ref2, atol=1e-4, rtol=1e-4), "tiled mismatch"

    print("KERNEL_OK")
</pallas_src>

<mosaic_0001>
module attributes {stable_mosaic.version = 11 : i64} {
  func.func @_flash_attention_kernel(%arg0: i32, %arg1: i32, %arg2: i32, %arg3: memref<1x8x32xf32, #tpu.memory_space<vmem>>, %arg4: memref<1x128x32xf32, #tpu.memory_space<vmem>>, %arg5: memref<1x128x32xf32, #tpu.memory_space<vmem>>, %arg6: memref<1x8x32xf32, #tpu.memory_space<vmem>>, %arg7: memref<8x1xf32, #tpu.memory_space<vmem>>, %arg8: memref<8x1xf32, #tpu.memory_space<vmem>>, %arg9: memref<8x32xf32, #tpu.memory_space<vmem>>) attributes {dimension_semantics = [#tpu.dimension_semantics<parallel>, #tpu.dimension_semantics<parallel>, #tpu.dimension_semantics<arbitrary>], iteration_bounds = array<i64: 8, 1, 1>, scalar_prefetch = 0 : i64, scratch_operands = 3 : i64, tpu.core_type = #tpu.core_type<tc>, window_params = [{transform_indices = @transform_0, window_bounds = array<i64: 1, 8, 32>}, {transform_indices = @transform_1, window_bounds = array<i64: 1, 128, 32>}, {transform_indices = @transform_2, window_bounds = array<i64: 1, 128, 32>}, {transform_indices = @transform_3, window_bounds = array<i64: 1, 8, 32>}]} {
    %c0_i32 = arith.constant 0 : i32
    %0 = arith.cmpi eq, %arg2, %c0_i32 : i32
    %1 = arith.extui %0 : i1 to i32
    %c0_i32_0 = arith.constant 0 : i32
    %2 = arith.cmpi ne, %1, %c0_i32_0 : i32
    scf.if %2 {
      %cst_28 = arith.constant -2.38197633E+38 : f32
      %45 = vector.broadcast %cst_28 : f32 to vector<8x1xf32>
      %c0_29 = arith.constant 0 : index
      %c0_30 = arith.constant 0 : index
      %46 = vector.load %arg7[%c0_29, %c0_30] : memref<8x1xf32, #tpu.memory_space<vmem>>, vector<8x1xf32>
      tpu.vector_store %arg7[%c0_29, %c0_30], %45 {strides = array<i32>} : memref<8x1xf32, #tpu.memory_space<vmem>>, vector<8x1xf32>,
      %cst_31 = arith.constant 0.000000e+00 : f32
      %47 = vector.broadcast %cst_31 : f32 to vector<8x1xf32>
      %c0_32 = arith.constant 0 : index
      %c0_33 = arith.constant 0 : index
      %48 = vector.load %arg8[%c0_32, %c0_33] : memref<8x1xf32, #tpu.memory_space<vmem>>, vector<8x1xf32>
      tpu.vector_store %arg8[%c0_32, %c0_33], %47 {strides = array<i32>} : memref<8x1xf32, #tpu.memory_space<vmem>>, vector<8x1xf32>,
      %cst_34 = arith.constant 0.000000e+00 : f32
      %49 = vector.broadcast %cst_34 : f32 to vector<8x32xf32>
      %c0_35 = arith.constant 0 : index
      %c0_36 = arith.constant 0 : index
      %50 = vector.load %arg9[%c0_35, %c0_36] : memref<8x32xf32, #tpu.memory_space<vmem>>, vector<8x32xf32>
      tpu.vector_store %arg9[%c0_35, %c0_36], %49 {strides = array<i32>} : memref<8x32xf32, #tpu.memory_space<vmem>>, vector<8x32xf32>,
    } else {
    }
    %c0 = arith.constant 0 : index
    %c0_1 = arith.constant 0 : index
    %c0_2 = arith.constant 0 : index
    %3 = vector.load %arg3[%c0, %c0_1, %c0_2] : memref<1x8x32xf32, #tpu.memory_space<vmem>>, vector<1x8x32xf32>
    %4 = vector.shape_cast %3 : vector<1x8x32xf32> to vector<8x32xf32>
    %cst = arith.constant 0.176776692 : f32
    %5 = vector.broadcast %cst : f32 to vector<8x32xf32>
    %6 = arith.mulf %4, %5 : vector<8x32xf32>
    %c0_3 = arith.constant 0 : index
    %c0_4 = arith.constant 0 : index
    %c0_5 = arith.constant 0 : index
    %7 = vector.load %arg4[%c0_3, %c0_4, %c0_5] : memref<1x128x32xf32, #tpu.memory_space<vmem>>, vector<1x128x32xf32>
    %8 = vector.shape_cast %7 : vector<1x128x32xf32> to vector<128x32xf32>
    %c0_6 = arith.constant 0 : index
    %c0_7 = arith.constant 0 : index
    %c0_8 = arith.constant 0 : index
    %9 = vector.load %arg5[%c0_6, %c0_7, %c0_8] : memref<1x128x32xf32, #tpu.memory_space<vmem>>, vector<1x128x32xf32>
    %10 = vector.shape_cast %9 : vector<1x128x32xf32> to vector<128x32xf32>
    %cst_9 = arith.constant dense<0.000000e+00> : vector<8x128xf32>
    %11 = tpu.matmul %6, %8, %cst_9 {dimension_numbers = #tpu.dot_dimension_numbers<[1], [1], [0], [0], [0, 0, 1, 0], [], []>} : vector<8x32xf32>, vector<128x32xf32>, vector<8x128xf32> -> vector<8x128xf32>
    %c128_i32 = arith.constant 128 : i32
    %12 = arith.muli %arg2, %c128_i32 : i32
    %13 = tpu.iota {dimensions = array<i32: 1>} : vector<8x128xi32>
    %14 = vector.broadcast %12 : i32 to vector<8x128xi32>
    %15 = arith.addi %14, %13 : vector<8x128xi32>
    %c8_i32 = arith.constant 8 : i32
    %16 = vector.broadcast %c8_i32 : i32 to vector<8x128xi32>
    %17 = arith.cmpi slt, %15, %16 : vector<8x128xi32>
    %cst_10 = arith.constant -2.38197633E+38 : f32
    %18 = vector.broadcast %cst_10 : f32 to vector<8x128xf32>
    %19 = arith.select %17, %11, %18 : vector<8x128xi1>, vector<8x128xf32>
    %c0_11 = arith.constant 0 : index
    %c0_12 = arith.constant 0 : index
    %20 = vector.load %arg7[%c0_11, %c0_12] : memref<8x1xf32, #tpu.memory_space<vmem>>, vector<8x1xf32>
    %cst_13 = arith.constant dense<0xFF800000> : vector<8xf32>
    %21 = vector.multi_reduction <maximumf>, %19, %cst_13 [1] : vector<8x128xf32> to vector<8xf32>
    %22 = vector.shape_cast %21 : vector<8xf32> to vector<8x1xf32>
    %23 = arith.maximumf %20, %22 : vector<8x1xf32>
    %24 = arith.subf %20, %23 : vector<8x1xf32>
    %25 = math.exp %24 : vector<8x1xf32>
    %26 = vector.broadcast %23 : vector<8x1xf32> to vector<8x128xf32>
    %27 = arith.subf %19, %26 : vector<8x128xf32>
    %28 = math.exp %27 : vector<8x128xf32>
    %c0_14 = arith.constant 0 : index
    %c0_15 = arith.constant 0 : index
    %29 = vector.load %arg8[%c0_14, %c0_15] : memref<8x1xf32, #tpu.memory_space<vmem>>, vector<8x1xf32>
    %30 = arith.mulf %25, %29 : vector<8x1xf32>
    %cst_16 = arith.constant dense<0.000000e+00> : vector<8xf32>
    %31 = vector.multi_reduction <add>, %28, %cst_16 [1] : vector<8x128xf32> to vector<8xf32>
    %32 = vector.shape_cast %31 : vector<8xf32> to vector<8x1xf32>
    %33 = arith.addf %30, %32 : vector<8x1xf32>
    %c0_17 = arith.constant 0 : index
    %c0_18 = arith.constant 0 : index
    %34 = vector.load %arg8[%c0_17, %c0_18] : memref<8x1xf32, #tpu.memory_space<vmem>>, vector<8x1xf32>
    tpu.vector_store %arg8[%c0_17, %c0_18], %33 {strides = array<i32>} : memref<8x1xf32, #tpu.memory_space<vmem>>, vector<8x1xf32>,
    %c0_19 = arith.constant 0 : index
    %c0_20 = arith.constant 0 : index
    %35 = vector.load %arg9[%c0_19, %c0_20] : memref<8x32xf32, #tpu.memory_space<vmem>>, vector<8x32xf32>
    %36 = vector.broadcast %25 : vector<8x1xf32> to vector<8x32xf32>
    %37 = arith.mulf %36, %35 : vector<8x32xf32>
    %cst_21 = arith.constant dense<0.000000e+00> : vector<8x32xf32>
    %38 = tpu.matmul %28, %10, %cst_21 {dimension_numbers = #tpu.dot_dimension_numbers<[1], [0], [0], [1], [0, 0, 1, 1], [], []>} : vector<8x128xf32>, vector<128x32xf32>, vector<8x32xf32> -> vector<8x32xf32>
    %39 = arith.addf %37, %38 : vector<8x32xf32>
    %c0_22 = arith.constant 0 : index
    %c0_23 = arith.constant 0 : index
    %40 = vector.load %arg9[%c0_22, %c0_23] : memref<8x32xf32, #tpu.memory_space<vmem>>, vector<8x32xf32>
    tpu.vector_store %arg9[%c0_22, %c0_23], %39 {strides = array<i32>} : memref<8x32xf32, #tpu.memory_space<vmem>>, vector<8x32xf32>,
    %c0_24 = arith.constant 0 : index
    %c0_25 = arith.constant 0 : index
    %41 = vector.load %arg7[%c0_24, %c0_25] : memref<8x1xf32, #tpu.memory_space<vmem>>, vector<8x1xf32>
    tpu.vector_store %arg7[%c0_24, %c0_25], %23 {strides = array<i32>} : memref<8x1xf32, #tpu.memory_space<vmem>>, vector<8x1xf32>,
    %c0_i32_26 = arith.constant 0 : i32
    %42 = arith.cmpi eq, %arg2, %c0_i32_26 : i32
    %43 = arith.extui %42 : i1 to i32
    %c0_i32_27 = arith.constant 0 : i32
    %44 = arith.cmpi ne, %43, %c0_i32_27 : i32
    scf.if %44 {
      %c0_28 = arith.constant 0 : index
      %c0_29 = arith.constant 0 : index
      %45 = vector.load %arg8[%c0_28, %c0_29] : memref<8x1xf32, #tpu.memory_space<vmem>>, vector<8x1xf32>
      %46 = tpu.reciprocal %45 {approx = true} : vector<8x1xf32> -> vector<8x1xf32>
      %47 = arith.mulf %45, %46 : vector<8x1xf32>
      %cst_30 = arith.constant 2.000000e+00 : f32
      %48 = vector.broadcast %cst_30 : f32 to vector<8x1xf32>
      %49 = arith.subf %48, %47 : vector<8x1xf32>
      %50 = arith.mulf %46, %49 : vector<8x1xf32>
      %c0_31 = arith.constant 0 : index
      %c0_32 = arith.constant 0 : index
      %51 = vector.load %arg9[%c0_31, %c0_32] : memref<8x32xf32, #tpu.memory_space<vmem>>, vector<8x32xf32>
      %52 = vector.broadcast %50 : vector<8x1xf32> to vector<8x32xf32>
      %53 = arith.mulf %51, %52 : vector<8x32xf32>
      %c0_33 = arith.constant 0 : index
      %c0_34 = arith.constant 0 : index
      %c0_35 = arith.constant 0 : index
      %54 = vector.load %arg6[%c0_33, %c0_34, %c0_35] : memref<1x8x32xf32, #tpu.memory_space<vmem>>, vector<1x8x32xf32>
      %55 = vector.shape_cast %54 : vector<1x8x32xf32> to vector<8x32xf32>
      %56 = vector.shape_cast %53 : vector<8x32xf32> to vector<1x8x32xf32>
      tpu.vector_store %arg6[%c0_33, %c0_34, %c0_35], %56 {strides = array<i32>} : memref<1x8x32xf32, #tpu.memory_space<vmem>>, vector<1x8x32xf32>,
    } else {
    }
    return
  }
  func.func @transform_0(%arg0: i32, %arg1: i32, %arg2: i32) -> (i32, i32, i32) {
    %c0_i32 = arith.constant 0 : i32
    %c0_i32_0 = arith.constant 0 : i32
    return %arg0, %arg1, %c0_i32 : i32, i32, i32
  }
  func.func @transform_1(%arg0: i32, %arg1: i32, %arg2: i32) -> (i32, i32, i32) {
    %c0_i32 = arith.constant 0 : i32
    %c0_i32_0 = arith.constant 0 : i32
    return %arg0, %arg2, %c0_i32 : i32, i32, i32
  }
  func.func @transform_2(%arg0: i32, %arg1: i32, %arg2: i32) -> (i32, i32, i32) {
    %c0_i32 = arith.constant 0 : i32
    %c0_i32_0 = arith.constant 0 : i32
    return %arg0, %arg2, %c0_i32 : i32, i32, i32
  }
  func.func @transform_3(%arg0: i32, %arg1: i32, %arg2: i32) -> (i32, i32, i32) {
    %c0_i32 = arith.constant 0 : i32
    %c0_i32_0 = arith.constant 0 : i32
    return %arg0, %arg1, %c0_i32 : i32, i32, i32
  }
}

</mosaic_0001>

<llo_original>
// kernel: tpu_custom_call.1
$region0: #{tpu_custom_call.1}
  #allocation0 [shape = 'u32[]', space=smem, size = 0x4, offset = 0x4, fixed_abs, tag = 'smem constant byte address 0x4 - core index']
  #allocation1 [shape = 'u32[144,128]{1,0:T(1,128)}', space=vmem, size = 0x12000, scoped, tag = 'internal scratch']
  #allocation2 [shape = 'f32[8,1]{1,0:T(8,128)}', space=vmem, size = 0x1000, scoped, tag = 'scratch operand']
  #allocation3 [shape = 'f32[8,1]{1,0:T(8,128)}', space=vmem, size = 0x1000, scoped, tag = 'scratch operand']
  #allocation4 [shape = 'f32[8,32]{1,0:T(8,128)}', space=vmem, size = 0x1000, scoped, tag = 'scratch operand']
  %s0 = inlined_call_operand.vmem [shape: f32[8,8,32], index: 0, kind: input, shape index: {}]
  %s1 = inlined_call_operand.vmem [shape: f32[8,128,32], index: 1, kind: input, shape index: {}]
  %s2 = inlined_call_operand.vmem [shape: f32[8,128,32], index: 2, kind: input, shape index: {}]
  %s3 = inlined_call_operand.hbm [shape: f32[8,8,32], index: 3, kind: output, shape index: {}]
  %s4 = sld [smem:[#allocation0]]
  $region53: #{tpu_custom_call.1} parent=0
    _
  %s6 = ssub.s32 1, %s4
  %s7 = scalar_select 0, %s6, %s4
  $region1: #{tpu_custom_call.1} parent=0
    #allocation5 [shape = 'u8[8192]{0}', space=vmem, size = 0x2000, scoped, tag = 'output window, operand 0']
    #allocation6 [shape = 's32[2]{0}', space=sflag, size = 0x8, scoped, tag = 'scoped memory for tpu_custom_call.1']
    %8 = vsyncpa [#allocation6], 0
    %s9 = scalar_lea.sflag [#allocation6], 1
    %10 = vsyncpa %s9, 0
    loop: start=0, step=1, limit=10
    $region2: #{tpu_custom_call.1} parent=1 // loop_pre_header
      _
    $region3: #{tpu_custom_call.1} parent=1 // loop_header
      %s12 = sphi 0, %s16
      %p13 = scmp.ge.s32.totalorder %s12, 10
      %s19 = sphi 0, %s38
      %s20 = sphi 0, %s34
      %s21 = sphi 0, %s30
      %s22 = sphi 0, %s19
      %s23 = sphi 0, %s20
      %s24 = sphi 0, %s21
      %s25 = sphi 0, %s22
      %s26 = sphi 0, %s23
      %s27 = sphi 0, %s24
      %s43 = sphi 0, %s45
      %s46 = sphi 0, %s43
      %s47 = sphi 0, %s46
      %s63 = sphi 0, %s47
      %s71 = sphi 0, %s73
      %s74 = sphi 0, %s71
      %s75 = sphi 0, %s74
      %s91 = sphi 0, %s75
      %s99 = sphi 0, %s101
      %s102 = sphi 0, %s99
      %s103 = sphi 0, %s102
      %s119 = sphi 0, %s103
      %s127 = sphi 0, %s129
      %s130 = sphi 0, %s127
      %s131 = sphi 0, %s130
      %s147 = sphi 0, %s131
    $region4: #{tpu_custom_call.1} parent=1 // loop_header_branch
      %15 = sbr.rel (%p13) target = $region8
    $region5: #{tpu_custom_call.1} parent=1 // loop_body
      %s17 = ssub.s32 %s12, 1
      %s18 = ssub.s32 %s12, 2
      %s28 = sadd.s32 1, %s21
      %p29 = scmp.ge.s32.totalorder %s28, 1
      %s30 = scalar_select %p29, 0, %s28
      %s31 = sadd.s32 1, %s20
      %s32 = scalar_select %p29, %s31, %s20
      %p33 = scmp.ge.s32.totalorder %s32, 1
      %s34 = scalar_select %p33, 0, %s32
      %s35 = sadd.s32 1, %s19
      %s36 = scalar_select %p33, %s35, %s19
      %p37 = scmp.ge.s32.totalorder %s36, 8
      %s38 = scalar_select %p37, 0, %s36
      %s39 = ssub.s32 %s19, %s38
      %s40 = ssub.s32 %s20, %s34
      %s41 = sor.u32 %s39, %s40
      %p42 = scmp.eq.s32.totalorder %s41, 0
      %s44 = sadd.s32 %s43, 1
      %s45 = scalar_select %p42, %s43, %s44
      %p48 = pneg %p42
      %p49 = scmp.eq.s32.totalorder %s12, 7
      %p50 = por %p48, %p49
      %p51 = scmp.ne.s32.totalorder %s43, %s46
      %p52 = scmp.eq.s32.totalorder %s12, 0
      %p53 = por %p51, %p52
      %p54 = scmp.ne.s32.totalorder %s43, %s46
      %p55 = scmp.eq.s32.totalorder %s17, 7
      %p56 = por %p54, %p55
      %p57 = scmp.ne.s32.totalorder %s46, %s47
      %p58 = scmp.eq.s32.totalorder %s17, 0
      %p59 = por %p57, %p58
      %p60 = scmp.ne.s32.totalorder %s46, %s47
      %p61 = scmp.eq.s32.totalorder %s18, 7
      %p62 = por %p60, %p61
      %p64 = scmp.ne.s32.totalorder %s47, %s63
      %p65 = scmp.eq.s32.totalorder %s18, 0
      %p66 = por %p64, %p65
      %s67 = ssub.s32 %s19, %s38
      %s68 = ssub.s32 %s21, %s30
      %s69 = sor.u32 %s67, %s68
      %p70 = scmp.eq.s32.totalorder %s69, 0
      %s72 = sadd.s32 %s71, 1
      %s73 = scalar_select %p70, %s71, %s72
      %p76 = pneg %p70
      %p77 = scmp.eq.s32.totalorder %s12, 7
      %p78 = por %p76, %p77
      %p79 = scmp.ne.s32.totalorder %s71, %s74
      %p80 = scmp.eq.s32.totalorder %s12, 0
      %p81 = por %p79, %p80
      %p82 = scmp.ne.s32.totalorder %s71, %s74
      %p83 = scmp.eq.s32.totalorder %s17, 7
      %p84 = por %p82, %p83
      %p85 = scmp.ne.s32.totalorder %s74, %s75
      %p86 = scmp.eq.s32.totalorder %s17, 0
      %p87 = por %p85, %p86
      %p88 = scmp.ne.s32.totalorder %s74, %s75
      %p89 = scmp.eq.s32.totalorder %s18, 7
      %p90 = por %p88, %p89
      %p92 = scmp.ne.s32.totalorder %s75, %s91
      %p93 = scmp.eq.s32.totalorder %s18, 0
      %p94 = por %p92, %p93
      %s95 = ssub.s32 %s19, %s38
      %s96 = ssub.s32 %s21, %s30
      %s97 = sor.u32 %s95, %s96
      %p98 = scmp.eq.s32.totalorder %s97, 0
      %s100 = sadd.s32 %s99, 1
      %s101 = scalar_select %p98, %s99, %s100
      %p104 = pneg %p98
      %p105 = scmp.eq.s32.totalorder %s12, 7
      %p106 = por %p104, %p105
      %p107 = scmp.ne.s32.totalorder %s99, %s102
      %p108 = scmp.eq.s32.totalorder %s12, 0
      %p109 = por %p107, %p108
      %p110 = scmp.ne.s32.totalorder %s99, %s102
      %p111 = scmp.eq.s32.totalorder %s17, 7
      %p112 = por %p110, %p111
      %p113 = scmp.ne.s32.totalorder %s102, %s103
      %p114 = scmp.eq.s32.totalorder %s17, 0
      %p115 = por %p113, %p114
      %p116 = scmp.ne.s32.totalorder %s102, %s103
      %p117 = scmp.eq.s32.totalorder %s18, 7
      %p118 = por %p116, %p117
      %p120 = scmp.ne.s32.totalorder %s103, %s119
      %p121 = scmp.eq.s32.totalorder %s18, 0
      %p122 = por %p120, %p121
      %s123 = ssub.s32 %s19, %s38
      %s124 = ssub.s32 %s20, %s34
      %s125 = sor.u32 %s123, %s124
      %p126 = scmp.eq.s32.totalorder %s125, 0
      %s128 = sadd.s32 %s127, 1
      %s129 = scalar_select %p126, %s127, %s128
      %p132 = pneg %p126
      %p133 = scmp.eq.s32.totalorder %s12, 7
      %p134 = por %p132, %p133
      %p135 = scmp.ne.s32.totalorder %s127, %s130
      %p136 = scmp.eq.s32.totalorder %s12, 0
      %p137 = por %p135, %p136
      %p138 = scmp.ne.s32.totalorder %s127, %s130
      %p139 = scmp.eq.s32.totalorder %s17, 7
      %p140 = por %p138, %p139
      %p141 = scmp.ne.s32.totalorder %s130, %s131
      %p142 = scmp.eq.s32.totalorder %s17, 0
      %p143 = por %p141, %p142
      %p144 = scmp.ne.s32.totalorder %s130, %s131
      %p145 = scmp.eq.s32.totalorder %s18, 7
      %p146 = por %p144, %p145
      %p148 = scmp.ne.s32.totalorder %s131, %s147
      %p149 = scmp.eq.s32.totalorder %s18, 0
      %p150 = por %p148, %p149
      %p151 = scmp.le.s32.totalorder 1, %s12
      %p152 = scmp.lt.s32.totalorder %s12, 9
      %p153 = pnand %p151, %p152
      %p154 = pneg %p153
      // Predicated region
      $region9: #{tpu_custom_call.1} parent=5 // pred_check
        _
      $region10: #{tpu_custom_call.1} parent=5 // pred_check_branch
        %156 = sbr.rel (%p153) target = $region12
      $region11: #{tpu_custom_call.1} parent=5 // pred_region
        %s157 = ssub.s32 %s12, 1
      $region12: #{tpu_custom_call.1} parent=5 // pred_fallthru
        _
      %p158 = scmp.lt.s32.totalorder %s12, 8
      // Predicated region
      $region13: #{tpu_custom_call.1} parent=5 // pred_check
        %p159 = pneg %p158
      $region14: #{tpu_custom_call.1} parent=5 // pred_check_branch
        %161 = sbr.rel (%p159) target = $region16
      $region15: #{tpu_custom_call.1} parent=5 // pred_region
        // Predicated region
        $region17: #{tpu_custom_call.1} parent=15 // pred_check
          %p162 = pneg %p53
        $region18: #{tpu_custom_call.1} parent=15 // pred_check_branch
          %164 = sbr.rel (%p162) target = $region20
        $region19: #{tpu_custom_call.1} parent=15 // pred_region
          %p165 = scmp.lt.s32.totalorder %s19, 7
          %s166 = scalar_select %p165, %s19, 7
          %p167 = scmp.lt.s32.totalorder %s20, 0
          %s168 = scalar_select %p167, %s20, 0
          %s169 = sadd.s32 %s168, %s166
          %s170 = smul.addr %s169, 8
          %s171 = scalar_lea.vmem %s0, %s170
        $region20: #{tpu_custom_call.1} parent=15 // pred_fallthru
          _
        // Predicated region
        $region21: #{tpu_custom_call.1} parent=15 // pred_check
          %p172 = pneg %p81
        $region22: #{tpu_custom_call.1} parent=15 // pred_check_branch
          %174 = sbr.rel (%p172) target = $region24
        $region23: #{tpu_custom_call.1} parent=15 // pred_region
          %s175 = smul.u32 16, %s21
          %p176 = scmp.lt.s32.totalorder %s19, 7
          %s177 = scalar_select %p176, %s19, 7
          %p178 = scmp.lt.s32.totalorder %s175, 15
          %s179 = scalar_select %p178, %s175, 15
          %s180 = smul.addr %s177, 16
          %s181 = sadd.s32 %s179, %s180
          %s182 = smul.addr %s181, 8
          %s183 = scalar_lea.vmem %s1, %s182
          %s184 = smul.u32 16, %s21
        $region24: #{tpu_custom_call.1} parent=15 // pred_fallthru
          _
        // Predicated region
        $region25: #{tpu_custom_call.1} parent=15 // pred_check
          %p185 = pneg %p109
        $region26: #{tpu_custom_call.1} parent=15 // pred_check_branch
          %187 = sbr.rel (%p185) target = $region28
        $region27: #{tpu_custom_call.1} parent=15 // pred_region
          %s188 = smul.u32 16, %s21
          %p189 = scmp.lt.s32.totalorder %s19, 7
          %s190 = scalar_select %p189, %s19, 7
          %p191 = scmp.lt.s32.totalorder %s188, 15
          %s192 = scalar_select %p191, %s188, 15
          %s193 = smul.addr %s190, 16
          %s194 = sadd.s32 %s192, %s193
          %s195 = smul.addr %s194, 8
          %s196 = scalar_lea.vmem %s2, %s195
          %s197 = smul.u32 16, %s21
        $region28: #{tpu_custom_call.1} parent=15 // pred_fallthru
          _
      $region16: #{tpu_custom_call.1} parent=5 // pred_fallthru
        _
      %p198 = scmp.le.s32.totalorder 1, %s12
      %p199 = scmp.lt.s32.totalorder %s12, 9
      %p200 = pnand %p198, %p199
      %p201 = pneg %p200
      // Predicated region
      $region29: #{tpu_custom_call.1} parent=5 // pred_check
        _
      $region30: #{tpu_custom_call.1} parent=5 // pred_check_branch
        %203 = sbr.rel (%p200) target = $region32
      $region31: #{tpu_custom_call.1} parent=5 // pred_region
        %s204 = ssub.s32 %s12, 1
        %p205 = scmp.lt.s32.totalorder %s22, 7
        %s206 = scalar_select %p205, %s22, 7
        %p207 = scmp.lt.s32.totalorder %s23, 0
        %s208 = scalar_select %p207, %s23, 0
        %s209 = sadd.s32 %s208, %s206
        %s210 = smul.addr %s209, 8
        %s211 = scalar_lea.vmem %s0, %s210
        %p212 = pneg %p59
        %p213 = pneg %p56
        %s214 = smul.u32 16, %s24
        %p215 = scmp.lt.s32.totalorder %s22, 7
        %s216 = scalar_select %p215, %s22, 7
        %p217 = scmp.lt.s32.totalorder %s214, 15
        %s218 = scalar_select %p217, %s214, 15
        %s219 = smul.addr %s216, 16
        %s220 = sadd.s32 %s218, %s219
        %s221 = smul.addr %s220, 8
        %s222 = scalar_lea.vmem %s1, %s221
        %p223 = pneg %p87
        %p224 = pneg %p84
        %s225 = smul.u32 16, %s24
        %p226 = scmp.lt.s32.totalorder %s22, 7
        %s227 = scalar_select %p226, %s22, 7
        %p228 = scmp.lt.s32.totalorder %s225, 15
        %s229 = scalar_select %p228, %s225, 15
        %s230 = smul.addr %s227, 16
        %s231 = sadd.s32 %s229, %s230
        %s232 = smul.addr %s231, 8
        %s233 = scalar_lea.vmem %s2, %s232
        %p234 = pneg %p115
        %p235 = pneg %p112
        %p236 = pneg %p143
        %p237 = pneg %p140
        %s238 = sand.u32 %s130, 1
        %s239 = scalar_lea.sflag [#allocation6], %s238
        %s240 = sand.u32 %s130, 1
        %s241 = smul.addr %s240, 8
        %s242 = scalar_lea.vmem [#allocation5], %s241
        %p243 = scmp.lt.s32.totalorder %s22, 7
        %s244 = scalar_select %p243, %s22, 7
        %p245 = scmp.lt.s32.totalorder %s23, 0
        %s246 = scalar_select %p245, %s23, 0
        %s247 = sadd.s32 %s246, %s244
        %s248 = smul.addr %s247, 8
        %s249 = scalar_lea.vmem %s0, %s248
        %s250 = smul.u32 16, %s24
        %p251 = scmp.lt.s32.totalorder %s22, 7
        %s252 = scalar_select %p251, %s22, 7
        %p253 = scmp.lt.s32.totalorder %s250, 15
        %s254 = scalar_select %p253, %s250, 15
        %s255 = smul.addr %s252, 16
        %s256 = sadd.s32 %s254, %s255
        %s257 = smul.addr %s256, 8
        %s258 = scalar_lea.vmem %s1, %s257
        %s259 = smul.u32 16, %s24
        %s260 = smul.u32 16, %s24
        %p261 = scmp.lt.s32.totalorder %s22, 7
        %s262 = scalar_select %p261, %s22, 7
        %p263 = scmp.lt.s32.totalorder %s260, 15
        %s264 = scalar_select %p263, %s260, 15
        %s265 = smul.addr %s262, 16
        %s266 = sadd.s32 %s264, %s265
        %s267 = smul.addr %s266, 8
        %s268 = scalar_lea.vmem %s2, %s267
        %s269 = smul.u32 16, %s24
        %p270 = scmp.eq.s32.totalorder %s24, 0
        // Predicated region
        $region33: #{tpu_custom_call.1} parent=31 // pred_check
          %p271 = pneg %p270
        $region34: #{tpu_custom_call.1} parent=31 // pred_check_branch
          %273 = sbr.rel (%p271) target = $region36
        $region35: #{tpu_custom_call.1} parent=31 // pred_region
          %vm274 = vcmask 7168
          %275 = vst.msk [vmem:[#allocation2] sm:$0xff] %vm274, -2.3819763e+38
          %276 = vst.msk [vmem:[#allocation3] sm:$0xff] %vm274, 0.0
          %vm277 = vcmask 261120
          %278 = vst.msk [vmem:[#allocation4] sm:$0xff] %vm277, 0.0
        $region36: #{tpu_custom_call.1} parent=31 // pred_fallthru
          _
        %v279 = vld [vmem:[%s249] sm:$0xff]
        %v280 = vmul.f32 %v279, 0.17677669
        %v281 = vld [vmem:[%s258] sm:$0xff]
        %v282 = vld [vmem:[%s258 + $0x8] sm:$0xff]
        %v283 = vld [vmem:[%s258 + $0x10] sm:$0xff]
        %v284 = vld [vmem:[%s258 + $0x18] sm:$0xff]
        %v285 = vld [vmem:[%s258 + $0x20] sm:$0xff]
        %v286 = vld [vmem:[%s258 + $0x28] sm:$0xff]
        %v287 = vld [vmem:[%s258 + $0x30] sm:$0xff]
        %v288 = vld [vmem:[%s258 + $0x38] sm:$0xff]
        %v289 = vld [vmem:[%s258 + $0x40] sm:$0xff]
        %v290 = vld [vmem:[%s258 + $0x48] sm:$0xff]
        %v291 = vld [vmem:[%s258 + $0x50] sm:$0xff]
        %v292 = vld [vmem:[%s258 + $0x58] sm:$0xff]
        %v293 = vld [vmem:[%s258 + $0x60] sm:$0xff]
        %v294 = vld [vmem:[%s258 + $0x68] sm:$0xff]
        %v295 = vld [vmem:[%s258 + $0x70] sm:$0xff]
        %v296 = vld [vmem:[%s258 + $0x78] sm:$0xff]
        %v297 = vld [vmem:[%s268] sm:$0xff]
        %v298 = vld [vmem:[%s268 + $0x8] sm:$0xff]
        %v299 = vld [vmem:[%s268 + $0x10] sm:$0xff]
        %v300 = vld [vmem:[%s268 + $0x18] sm:$0xff]
        %v301 = vld [vmem:[%s268 + $0x20] sm:$0xff]
        %v302 = vld [vmem:[%s268 + $0x28] sm:$0xff]
        %v303 = vld [vmem:[%s268 + $0x30] sm:$0xff]
        %v304 = vld [vmem:[%s268 + $0x38] sm:$0xff]
        %v305 = vld [vmem:[%s268 + $0x40] sm:$0xff]
        %v306 = vld [vmem:[%s268 + $0x48] sm:$0xff]
        %v307 = vld [vmem:[%s268 + $0x50] sm:$0xff]
        %v308 = vld [vmem:[%s268 + $0x58] sm:$0xff]
        %v309 = vld [vmem:[%s268 + $0x60] sm:$0xff]
        %v310 = vld [vmem:[%s268 + $0x68] sm:$0xff]
        %v311 = vld [vmem:[%s268 + $0x70] sm:$0xff]
        %v312 = vld [vmem:[%s268 + $0x78] sm:$0xff]
        %vm313 = vcmask 261120
        %v315 = vsel %vm313, %v280, 0
        %v318 = vsel %vm313, %v281, 0
        %v321 = vsel %vm313, %v282, 0
        %v324 = vsel %vm313, %v283, 0
        %v327 = vsel %vm313, %v284, 0
        %v330 = vsel %vm313, %v285, 0
        %v333 = vsel %vm313, %v286, 0
        %v336 = vsel %vm313, %v287, 0
        %v339 = vsel %vm313, %v288, 0
        %v342 = vsel %vm313, %v289, 0
        %v345 = vsel %vm313, %v290, 0
        %v348 = vsel %vm313, %v291, 0
        %v351 = vsel %vm313, %v292, 0
        %v354 = vsel %vm313, %v293, 0
        %v357 = vsel %vm313, %v294, 0
        %v360 = vsel %vm313, %v295, 0
        %v363 = vsel %vm313, %v296, 0
        %365 = vmatprep.subr.mxu0 0.0
        %366 = vmatpush1.xpose.msra.mxu0 %v318
        %367 = vmatprep.subr.mxu0 0.0
        %368 = vmatpush1.xpose.msra.mxu0 %v321
        %369 = vmatprep.subr.mxu0 0.0
        %370 = vmatpush1.xpose.msra.mxu0 %v324
        %371 = vmatprep.subr.mxu0 0.0
        %372 = vmatpush1.xpose.msra.mxu0 %v327
        %373 = vmatprep.subr.mxu0 0.0
        %374 = vmatpush1.xpose.msra.mxu0 %v330
        %375 = vmatprep.subr.mxu0 0.0
        %376 = vmatpush1.xpose.msra.mxu0 %v333
        %377 = vmatprep.subr.mxu0 0.0
        %378 = vmatpush1.xpose.msra.mxu0 %v336
        %379 = vmatprep.subr.mxu0 0.0
        %380 = vmatpush1.xpose.msra.mxu0 %v339
        %381 = vmatprep.subr.mxu0 0.0
        %382 = vmatpush1.xpose.msra.mxu0 %v342
        %383 = vmatprep.subr.mxu0 0.0
        %384 = vmatpush1.xpose.msra.mxu0 %v345
        %385 = vmatprep.subr.mxu0 0.0
        %386 = vmatpush1.xpose.msra.mxu0 %v348
        %387 = vmatprep.subr.mxu0 0.0
        %388 = vmatpush1.xpose.msra.mxu0 %v351
        %389 = vmatprep.subr.mxu0 0.0
        %390 = vmatpush1.xpose.msra.mxu0 %v354
        %391 = vmatprep.subr.mxu0 0.0
        %392 = vmatpush1.xpose.msra.mxu0 %v357
        %393 = vmatprep.subr.mxu0 0.0
        %394 = vmatpush1.xpose.msra.mxu0 %v360
        %395 = vmatprep.subr.mxu0 0.0
        %396 = vmatpush1.xpose.msra.mxu0 %v363
        %397 = vmatprep.subr.mxu0 0.0
        %398 = vmatpush1.xpose.msra.mxu0 0.0
        %399 = vmatprep.subr.mxu0 0.0
        %400 = vmatpush1.xpose.msra.mxu0 0.0
        %401 = vmatprep.subr.mxu0 0.0
        %402 = vmatpush1.xpose.msra.mxu0 0.0
        %403 = vmatprep.subr.mxu0 0.0
        %404 = vmatpush1.xpose.msra.mxu0 0.0
        %405 = vmatprep.subr.mxu0 0.0
        %406 = vmatpush1.xpose.msra.mxu0 0.0
        %407 = vmatprep.subr.mxu0 0.0
        %408 = vmatpush1.xpose.msra.mxu0 0.0
        %409 = vmatprep.subr.mxu0 0.0
        %410 = vmatpush1.xpose.msra.mxu0 0.0
        %411 = vmatprep.subr.mxu0 0.0
        %412 = vmatpush1.xpose.msra.mxu0 0.0
        %413 = vmatprep.subr.mxu0 0.0
        %414 = vmatpush1.xpose.msra.mxu0 0.0
        %415 = vmatprep.subr.mxu0 0.0
        %416 = vmatpush1.xpose.msra.mxu0 0.0
        %417 = vmatprep.subr.mxu0 0.0
        %418 = vmatpush1.xpose.msra.mxu0 0.0
        %419 = vmatprep.subr.mxu0 0.0
        %420 = vmatpush1.xpose.msra.mxu0 0.0
        %421 = vmatprep.subr.mxu0 0.0
        %422 = vmatpush1.xpose.msra.mxu0 0.0
        %423 = vmatprep.subr.mxu0 0.0
        %424 = vmatpush1.xpose.msra.mxu0 0.0
        %425 = vmatprep.subr.mxu0 0.0
        %426 = vmatpush1.xpose.msra.mxu0 0.0
        %427 = vmatprep.subr.mxu0 0.0
        %428 = vmatpush1.xpose.msra.mxu0 0.0
        %429 = vmatprep.mubr.f32.mxu0 0.0
        %430 = vmatmul.mubr.f32.gmra.mrb[0].mxu0 %v315
        %v431 = vpop.f32.mrb[0].mxu0
        %v432 = vadd.f32 0.0, %v431
        %v433 = vpop.f32.mrb[0].mxu0
        %434 = vdwg.mxu0
        %s435 = smul.u32 %s24, 128
        %v436 = vlaneseq
        %v437 = vand.u32 %v436, 127
        %v438 = vstv %s435
        %v439 = vadd.s32 %v438, %v437
        %vm440 = vcmp.lt.s32.totalorder %v439, 8
        %v441 = vsel %vm440, %v432, -2.3819763e+38
        %v442 = vld [vmem:[#allocation2] sm:$0xff]
        %443 = vmax.xlane.f32.xlu0 %v441
        %v444 = vpop.xlane.xlu0 %443
        %v445 = vmax.f32 %v442, %v444
        %v446 = vsub.f32 %v442, %v445
        %v447 = vmul.f32 %v446, 1.442695
        %v448 = vpow.pop %v447
        %450 = vset.pattern.permute.xlu0 0
        %451 = vperm.xlu0 %450, %v445
        %v452 = vpop.permute.xlu0 %451
        %v454 = vsub.f32 %v441, %v452
        %v455 = vmul.f32 %v454, 1.442695
        %v456 = vpow.pop %v455
        %v457 = vld [vmem:[#allocation3] sm:$0xff]
        %v458 = vmul.f32 %v448, %v457
        %459 = vadd.xlane.f32.xlu0 %v456
        %v460 = vpop.xlane.xlu0 %459
        %v461 = vadd.f32 %v458, %v460
        %vm462 = vcmask 7168
        %463 = vst.msk [vmem:[#allocation3] sm:$0xff] %vm462, %v461
        %v464 = vld [vmem:[#allocation4] sm:$0xff]
        %466 = vset.pattern.permute.xlu0 0
        %467 = vperm.xlu0 %466, %v448
        %v468 = vpop.permute.xlu0 %467
        %v470 = vmul.f32 %v468, %v464
        %471 = vmatprep.subr.mxu0 0.0
        %472 = vmatpush1.msra.mxu0 %v297
        %473 = vmatprep.subr.mxu0 0.0
        %474 = vmatpush1.msra.mxu0 %v298
        %475 = vmatprep.subr.mxu0 0.0
        %476 = vmatpush1.msra.mxu0 %v299
        %477 = vmatprep.subr.mxu0 0.0
        %478 = vmatpush1.msra.mxu0 %v300
        %479 = vmatprep.subr.mxu0 0.0
        %480 = vmatpush1.msra.mxu0 %v301
        %481 = vmatprep.subr.mxu0 0.0
        %482 = vmatpush1.msra.mxu0 %v302
        %483 = vmatprep.subr.mxu0 0.0
        %484 = vmatpush1.msra.mxu0 %v303
        %485 = vmatprep.subr.mxu0 0.0
        %486 = vmatpush1.msra.mxu0 %v304
        %487 = vmatprep.subr.mxu0 0.0
        %488 = vmatpush1.msra.mxu0 %v305
        %489 = vmatprep.subr.mxu0 0.0
        %490 = vmatpush1.msra.mxu0 %v306
        %491 = vmatprep.subr.mxu0 0.0
        %492 = vmatpush1.msra.mxu0 %v307
        %493 = vmatprep.subr.mxu0 0.0
        %494 = vmatpush1.msra.mxu0 %v308
        %495 = vmatprep.subr.mxu0 0.0
        %496 = vmatpush1.msra.mxu0 %v309
        %497 = vmatprep.subr.mxu0 0.0
        %498 = vmatpush1.msra.mxu0 %v310
        %499 = vmatprep.subr.mxu0 0.0
        %500 = vmatpush1.msra.mxu0 %v311
        %501 = vmatprep.subr.mxu0 0.0
        %502 = vmatpush1.msra.mxu0 %v312
        %503 = vmatprep.subr.mxu0 0.0
        %504 = vmatpush1.msra.mxu0 0.0
        %505 = vmatprep.subr.mxu0 0.0
        %506 = vmatpush1.msra.mxu0 0.0
        %507 = vmatprep.subr.mxu0 0.0
        %508 = vmatpush1.msra.mxu0 0.0
        %509 = vmatprep.subr.mxu0 0.0
        %510 = vmatpush1.msra.mxu0 0.0
        %511 = vmatprep.subr.mxu0 0.0
        %512 = vmatpush1.msra.mxu0 0.0
        %513 = vmatprep.subr.mxu0 0.0
        %514 = vmatpush1.msra.mxu0 0.0
        %515 = vmatprep.subr.mxu0 0.0
        %516 = vmatpush1.msra.mxu0 0.0
        %517 = vmatprep.subr.mxu0 0.0
        %518 = vmatpush1.msra.mxu0 0.0
        %519 = vmatprep.subr.mxu0 0.0
        %520 = vmatpush1.msra.mxu0 0.0
        %521 = vmatprep.subr.mxu0 0.0
        %522 = vmatpush1.msra.mxu0 0.0
        %523 = vmatprep.subr.mxu0 0.0
        %524 = vmatpush1.msra.mxu0 0.0
        %525 = vmatprep.subr.mxu0 0.0
        %526 = vmatpush1.msra.mxu0 0.0
        %527 = vmatprep.subr.mxu0 0.0
        %528 = vmatpush1.msra.mxu0 0.0
        %529 = vmatprep.subr.mxu0 0.0
        %530 = vmatpush1.msra.mxu0 0.0
        %531 = vmatprep.subr.mxu0 0.0
        %532 = vmatpush1.msra.mxu0 0.0
        %533 = vmatprep.subr.mxu0 0.0
        %534 = vmatpush1.msra.mxu0 0.0
        %535 = vmatprep.mubr.f32.mxu0 0.0
        %536 = vmatmul.mubr.f32.gmra.mrb[0].mxu0 %v456
        %v537 = vpop.f32.mrb[0].mxu0
        %v538 = vadd.f32 0.0, %v537
        %v539 = vpop.f32.mrb[0].mxu0
        %540 = vdwg.mxu0
        %v541 = vadd.f32 %v470, %v538
        %542 = vst.msk [vmem:[#allocation4] sm:$0xff] %vm313, %v541
        %543 = vst.msk [vmem:[#allocation2] sm:$0xff] %vm462, %v445
        // Predicated region
        $region37: #{tpu_custom_call.1} parent=31 // pred_check
          %p544 = pneg %p270
        $region38: #{tpu_custom_call.1} parent=31 // pred_check_branch
          %546 = sbr.rel (%p544) target = $region40
        $region39: #{tpu_custom_call.1} parent=31 // pred_region
          %v547 = vld [vmem:[#allocation3] sm:$0xff]
          %v548 = vrcp.pop %v547
          %v549 = vmul.f32 %v547, %v548
          %v550 = vsub.f32 2.0, %v549
          %v551 = vmul.f32 %v548, %v550
          %v552 = vld [vmem:[#allocation4] sm:$0xff]
          %554 = vset.pattern.permute.xlu0 0
          %555 = vperm.xlu0 %554, %v551
          %v556 = vpop.permute.xlu0 %555
          %v558 = vmul.f32 %v552, %v556
          %559 = vst.msk [vmem:[%s242] sm:$0xff] %vm313, %v558
        $region40: #{tpu_custom_call.1} parent=31 // pred_fallthru
          _
        %s560 = sand.u32 %s130, 1
        %s561 = scalar_lea.sflag [#allocation6], %s560
        %s562 = sand.u32 %s130, 1
        %s563 = smul.addr %s562, 8
        %s564 = scalar_lea.vmem [#allocation5], %s563
        // Predicated region
        $region41: #{tpu_custom_call.1} parent=31 // pred_check
          %p565 = pneg %p140
        $region42: #{tpu_custom_call.1} parent=31 // pred_check_branch
          %567 = sbr.rel (%p565) target = $region44
        $region43: #{tpu_custom_call.1} parent=31 // pred_region
          %s569 = ssub.s32 128, 128
          %570 = vsyncadd %s561, %s569
          %s571 = sadd.s32 %s23, %s22
          %s572 = smul.addr %s571, 128
          %s573 = scalar_lea.hbm %s3, %s572
          %s575 = sshll.u32 %s564, 4
          %s576 = int_to_ptr.vmem [resolvable:$true] %s575
          %578 = dma.vmem_to_hbm [thread:$0]  %s576, 128, %s573, %s561
        $region44: #{tpu_custom_call.1} parent=31 // pred_fallthru
          _
      $region32: #{tpu_custom_call.1} parent=5 // pred_fallthru
        _
      %p579 = scmp.le.s32.totalorder 2, %s12
      // Predicated region
      $region45: #{tpu_custom_call.1} parent=5 // pred_check
        %p580 = pneg %p579
      $region46: #{tpu_custom_call.1} parent=5 // pred_check_branch
        %582 = sbr.rel (%p580) target = $region48
      $region47: #{tpu_custom_call.1} parent=5 // pred_region
        %s583 = ssub.s32 %s12, 2
        // Predicated region
        $region49: #{tpu_custom_call.1} parent=47 // pred_check
          %p584 = pneg %p146
        $region50: #{tpu_custom_call.1} parent=47 // pred_check_branch
          %586 = sbr.rel (%p584) target = $region52
        $region51: #{tpu_custom_call.1} parent=47 // pred_region
          %s587 = sand.u32 %s131, 1
          %s588 = scalar_lea.sflag [#allocation6], %s587
          %s589 = sand.u32 %s131, 1
          %s590 = smul.addr %s589, 8
          %s591 = scalar_lea.vmem [#allocation5], %s590
          %592 = dma.done %s588, 128
        $region52: #{tpu_custom_call.1} parent=47 // pred_fallthru
          _
      $region48: #{tpu_custom_call.1} parent=5 // pred_fallthru
        _
    $region6: #{tpu_custom_call.1} parent=1 // loop_footer
      %s16 = sadd.s32 1, %s12
    $region7: #{tpu_custom_call.1} parent=1 // loop_footer_branch
      %11 = sbr.rel target = $region3
    $region8: #{tpu_custom_call.1} parent=1 // loop_exit
      _
    %593 = vsyncpa [#allocation6], 1
    %s594 = scalar_lea.sflag [#allocation6], 1
    %595 = vsyncpa %s594, 1

</llo_original>
